<compile_context>
chip_gen: v7x
topology: tpu7x:2x2x1
jax: 0.10.0
libtpu: 0.0.40
codegen_flags: <defaults>
</compile_context>

<pallas_src>
import jax
import jax.numpy as jnp
from jax.experimental import pallas as pl
from jax.experimental.pallas import tpu as pltpu


def layer_scale_kernel(x_ref, g_ref, o_ref):
    # x_ref: (tm, tn) tile of (packed) rows; g_ref: (1, tn) gamma, broadcast
    # over the sublane (row) axis by the VPU.
    o_ref[...] = x_ref[...] * g_ref[...]


def _round_up(a, b):
    return (a + b - 1) // b * b


def layer_scale(x, gamma, *, target_tile_bytes=2 * 1024 * 1024, max_tn=2048):
    """y = x * gamma.  x: (..., D), gamma: (D,).  Same shape/dtype as x."""
    orig_shape = x.shape
    D = orig_shape[-1]
    assert gamma.shape == (D,)

    dtype = x.dtype
    itemsize = jnp.dtype(dtype).itemsize
    # Sublane packing multiple: 8 for f32, 16 for bf16, 32 for int8/fp8.
    sub = max(8, 32 // itemsize)

    x2d = x.reshape(-1, D)
    M = x2d.shape[0]

    # ---- Make the last (lane) axis dense: width must be a multiple of 128 ----
    if D % 128 == 0:
        k, width = 1, D
        g_row = gamma.astype(dtype)
        x_rows = x2d
    elif 128 % D == 0:
        # Pack k logical rows into one lane-dense row of width 128.
        k, width = 128 // D, D
        g_row = jnp.tile(gamma.astype(dtype), k)  # (128,)
        x_rows = x2d
    else:
        # Pad the feature axis up to a multiple of 128 (padding is sliced off).
        k, width = 1, _round_up(D, 128)
        g_row = jnp.pad(gamma.astype(dtype), (0, width - D))
        x_rows = jnp.pad(x2d, ((0, 0), (0, width - D)))

    Dp = k * width  # lane width of the packed 2-D view; multiple of 128

    # ---- Column tile: largest multiple of 128 dividing Dp, capped at max_tn ----
    if Dp <= max_tn:
        tn = Dp
    else:
        tn = 128
        for cand in range(max_tn, 127, -128):
            if Dp % cand == 0:
                tn = cand
                break

    # ---- Row tile: ~target_tile_bytes per tile, multiple of `sub` ----
    Mp = -(-M // k)  # packed row count (before padding)
    rows_target = max(sub, target_tile_bytes // (tn * itemsize))
    rows_target = _round_up(rows_target, sub)
    tm = min(rows_target, _round_up(Mp, sub))
    # Keep at least a handful of grid steps on large inputs (v7x megacore).
    min_steps = 8
    if Mp >= min_steps * sub:
        tm = min(tm, max(sub, _round_up(-(-Mp // min_steps), sub)))

    # ---- Pad rows so the packed view tiles evenly (no divisibility assert) ----
    Mp_pad = _round_up(Mp, tm)
    row_pad = Mp_pad * k - M
    if row_pad > 0:
        x_rows = jnp.pad(x_rows, ((0, row_pad), (0, 0)))
    x_packed = x_rows.reshape(Mp_pad, Dp)
    g2d = g_row.reshape(1, Dp)

    grid = (Mp_pad // tm, Dp // tn)

    out = pl.pallas_call(
        layer_scale_kernel,
        out_shape=jax.ShapeDtypeStruct((Mp_pad, Dp), dtype),
        grid=grid,
        in_specs=[
            pl.BlockSpec((tm, tn), lambda i, j: (i, j)),  # x tile
            pl.BlockSpec((1, tn), lambda i, j: (0, j)),   # gamma column block
        ],
        out_specs=pl.BlockSpec((tm, tn), lambda i, j: (i, j)),
        compiler_params=pltpu.CompilerParams(
            dimension_semantics=("parallel", "parallel"),
        ),
        cost_estimate=pl.CostEstimate(
            flops=M * D,
            transcendentals=0,
            bytes_accessed=2 * M * D * itemsize + D * itemsize,
        ),
    )(x_packed, g2d)

    # ---- Unpack / strip padding ----
    out = out.reshape(Mp_pad * k, width)[:M, :D]
    return out.reshape(orig_shape)


if __name__ == "__main__":
    key = jax.random.PRNGKey(0)
    init_values = 1e-5

    # Primary case matching LayerScale(dim=32, init_values=1e-5): x (2, 8, 32).
    dim = 32
    gamma = init_values * jnp.ones((dim,), dtype=jnp.float32)
    x = jax.random.normal(key, (2, 8, dim), dtype=jnp.float32)
    y = jax.block_until_ready(layer_scale(x, gamma))
    assert y.shape == x.shape and y.dtype == x.dtype
    assert jnp.allclose(y, x * gamma, atol=1e-6, rtol=1e-6)

    # Exercise the padded-D path (D=192) and the row-tiled multi-step grid
    # path (D=256, more rows) at still-small shapes.
    for shape in [(2, 16, 192), (4, 64, 256)]:
        d = shape[-1]
        g = init_values * jnp.ones((d,), dtype=jnp.float32)
        xs = jax.random.normal(jax.random.fold_in(key, d), shape, dtype=jnp.float32)
        ys = jax.block_until_ready(layer_scale(xs, g))
        assert ys.shape == xs.shape and ys.dtype == xs.dtype
        assert jnp.allclose(ys, xs * g, atol=1e-6, rtol=1e-6)

    print("KERNEL_OK")
</pallas_src>

<mosaic_0001>
module attributes {stable_mosaic.version = 11 : i64} {
  func.func @layer_scale_kernel(%arg0: i32, %arg1: i32, %arg2: memref<8x128xf32, #tpu.memory_space<vmem>>, %arg3: memref<1x128xf32, #tpu.memory_space<vmem>>, %arg4: memref<8x128xf32, #tpu.memory_space<vmem>>) attributes {dimension_semantics = [#tpu.dimension_semantics<parallel>, #tpu.dimension_semantics<parallel>], iteration_bounds = array<i64: 1, 1>, scalar_prefetch = 0 : i64, scratch_operands = 0 : i64, tpu.core_type = #tpu.core_type<tc>, window_params = [{transform_indices = @transform_0, window_bounds = array<i64: 8, 128>}, {transform_indices = @transform_1, window_bounds = array<i64: 1, 128>}, {transform_indices = @transform_2, window_bounds = array<i64: 8, 128>}]} {
    %c0 = arith.constant 0 : index
    %c0_0 = arith.constant 0 : index
    %0 = vector.load %arg2[%c0, %c0_0] : memref<8x128xf32, #tpu.memory_space<vmem>>, vector<8x128xf32>
    %c0_1 = arith.constant 0 : index
    %c0_2 = arith.constant 0 : index
    %1 = vector.load %arg3[%c0_1, %c0_2] : memref<1x128xf32, #tpu.memory_space<vmem>>, vector<1x128xf32>
    %2 = vector.broadcast %1 : vector<1x128xf32> to vector<8x128xf32>
    %3 = arith.mulf %0, %2 : vector<8x128xf32>
    %c0_3 = arith.constant 0 : index
    %c0_4 = arith.constant 0 : index
    %4 = vector.load %arg4[%c0_3, %c0_4] : memref<8x128xf32, #tpu.memory_space<vmem>>, vector<8x128xf32>
    tpu.vector_store %arg4[%c0_3, %c0_4], %3 {strides = array<i32>} : memref<8x128xf32, #tpu.memory_space<vmem>>, vector<8x128xf32>,
    return
  }
  func.func @transform_0(%arg0: i32, %arg1: i32) -> (i32, i32) {
    %c0_i32 = arith.constant 0 : i32
    return %arg0, %arg1 : i32, i32
  }
  func.func @transform_1(%arg0: i32, %arg1: i32) -> (i32, i32) {
    %c0_i32 = arith.constant 0 : i32
    %c0_i32_0 = arith.constant 0 : i32
    return %c0_i32, %arg1 : i32, i32
  }
  func.func @transform_2(%arg0: i32, %arg1: i32) -> (i32, i32) {
    %c0_i32 = arith.constant 0 : i32
    return %arg0, %arg1 : i32, i32
  }
}

</mosaic_0001>

<llo_original>
// kernel: tpu_custom_call.1
$region0: #{tpu_custom_call.1}
  #allocation0 [shape = 'u32[]', space=smem, size = 0x4, offset = 0x4, fixed_abs, tag = 'smem constant byte address 0x4 - core index']
  #allocation1 [shape = 'u32[144,128]{1,0:T(1,128)}', space=vmem, size = 0x12000, scoped, tag = 'internal scratch']
  %s0 = inlined_call_operand.hbm [shape: f32[8,128], index: 0, kind: input, shape index: {}]
  %s1 = inlined_call_operand.vmem [shape: f32[1,128], index: 1, kind: input, shape index: {}]
  %s2 = inlined_call_operand.hbm [shape: f32[8,128], index: 2, kind: output, shape index: {}]
  %s3 = sld [smem:[#allocation0]]
  $region22: #{tpu_custom_call.1} parent=0
    _
  %s5 = ssub.s32 1, %s3
  %s6 = scalar_select 0, %s5, %s3
  $region1: #{tpu_custom_call.1} parent=0
    #allocation2 [shape = 'u8[4096]{0}', space=vmem, size = 0x1000, scoped, tag = 'input window, operand 0, single buffered']
    #allocation3 [shape = 's32[1]{0}', space=sflag, size = 0x4, scoped, tag = 'scoped memory for tpu_custom_call.1']
    #allocation4 [shape = 's32[1]{0}', space=sflag, size = 0x4, scoped, tag = 'scoped memory for tpu_custom_call.1']
    #allocation5 [shape = 'u8[4096]{0}', space=vmem, size = 0x1000, scoped, tag = 'output window, operand 0, single buffered']
    %7 = vsyncpa [#allocation3], 0
    %8 = vsyncpa [#allocation4], 0
    // Predicated region
    $region2: #{tpu_custom_call.1} parent=1 // pred_check
      _
    $region3: #{tpu_custom_call.1} parent=1 // pred_check_branch
      %10 = sbr.rel (0) target = $region5
    $region4: #{tpu_custom_call.1} parent=1 // pred_region
      %s12 = ssub.s32 128, 128
      %13 = vsyncadd [#allocation3], %s12
      %s15 = sshll.u32 [#allocation2], 4
      %s16 = int_to_ptr.vmem [resolvable:$true] %s15
      %18 = dma.hbm_to_vmem [thread:$0]  %s0, 128, %s16, [#allocation3]
    $region5: #{tpu_custom_call.1} parent=1 // pred_fallthru
      _
    // Predicated region
    $region6: #{tpu_custom_call.1} parent=1 // pred_check
      _
    $region7: #{tpu_custom_call.1} parent=1 // pred_check_branch
      %20 = sbr.rel (0) target = $region9
    $region8: #{tpu_custom_call.1} parent=1 // pred_region
      _
    $region9: #{tpu_custom_call.1} parent=1 // pred_fallthru
      _
    // Predicated region
    $region10: #{tpu_custom_call.1} parent=1 // pred_check
      _
    $region11: #{tpu_custom_call.1} parent=1 // pred_check_branch
      %22 = sbr.rel (0) target = $region13
    $region12: #{tpu_custom_call.1} parent=1 // pred_region
      %23 = dma.done [#allocation3], 128
    $region13: #{tpu_custom_call.1} parent=1 // pred_fallthru
      _
    %v24 = vld [vmem:[#allocation2] sm:$0xff]
    %v25 = vld [vmem:[%s1] sm:$0x1]
    %v27 = vlaneseq
    %v28 = vshrl.u32 %v27, 7
    %v29 = vsub.s32 0, %v28
    %v30 = vrot.slane %v25, %v29
    %v32 = vmul.f32 %v24, %v30
    %33 = vst [vmem:[#allocation5] sm:$0xff] %v32
    // Predicated region
    $region14: #{tpu_custom_call.1} parent=1 // pred_check
      _
    $region15: #{tpu_custom_call.1} parent=1 // pred_check_branch
      %35 = sbr.rel (0) target = $region17
    $region16: #{tpu_custom_call.1} parent=1 // pred_region
      %s37 = ssub.s32 128, 128
      %38 = vsyncadd [#allocation4], %s37
      %s40 = sshll.u32 [#allocation5], 4
      %s41 = int_to_ptr.vmem [resolvable:$true] %s40
      %43 = dma.vmem_to_hbm [thread:$0]  %s41, 128, %s2, [#allocation4]
    $region17: #{tpu_custom_call.1} parent=1 // pred_fallthru
      _
    // Predicated region
    $region18: #{tpu_custom_call.1} parent=1 // pred_check
      _
    $region19: #{tpu_custom_call.1} parent=1 // pred_check_branch
      %45 = sbr.rel (0) target = $region21
    $region20: #{tpu_custom_call.1} parent=1 // pred_region
      %46 = dma.done [#allocation4], 128
    $region21: #{tpu_custom_call.1} parent=1 // pred_fallthru
      _
    %47 = vsyncpa [#allocation3], 1
    %48 = vsyncpa [#allocation4], 1

</llo_original>
